<compile_context>
chip_gen: v5e
topology: v5e:2x2
jax: 0.10.0
libtpu: 0.0.40
codegen_flags: <defaults>
</compile_context>

<pallas_src>
import jax
import jax.numpy as jnp
from jax import lax
from jax.experimental import pallas as pl
from jax.experimental.pallas import tpu as pltpu


def _prelu(x, a):
    # PReLU(x) = max(0, x) + a * min(0, x);  `a` may be scalar or per-column.
    return jnp.where(x > 0.0, x, a * x)


def _prior_kernel(x_ref,                       # (TB, cond)        f32
                  w1_ref, b1_ref, a1_ref,      # (cond,512) bf16, (1,512) f32, (1,512) f32
                  w2_ref, b2_ref, a2_ref,      # (256,256)  bf16, (1,256) f32, (1,256) f32
                  w3_ref, b3_ref, a3_ref,      # (128,128)  bf16, (1,128) f32, (1,128) f32
                  w4_ref, b4_ref, a4_ref,      # (64,64)    bf16, (1,64)  f32, (1,64)  f32
                  w5_ref, b5_ref,              # (32,2L)    bf16, (1,2L)  f32
                  out_ref):                    # (TB, 2L) f32: [:, :L]=mu, [:, L:]=log_sigma^2
    tb = x_ref.shape[0]

    # --- Layer 1: both branches fused along output columns (lane split at 256).
    x = x_ref[...].astype(jnp.bfloat16)
    h1 = jnp.dot(x, w1_ref[...], preferred_element_type=jnp.float32) + b1_ref[...]
    h1 = _prelu(h1, a1_ref[...])
    n1 = w1_ref.shape[1] // 2                               # 256, lane-tile aligned
    # Stack the two branches on the ROW axis: rows [0:tb]=mu, [tb:2tb]=log_sigma^2.
    hs = jnp.concatenate([h1[:, :n1], h1[:, n1:]], axis=0)  # (2*tb, 256) f32
    # Dropout(p=0.8) after layers 1 & 2: identity in eval mode.

    def fused_layer(h, w_ref, b_ref, a_ref):
        # w_ref = [W_mu | W_ls] (K, 2N). Only the diagonal (mu-rows x mu-cols,
        # ls-rows x ls-cols) blocks of the product are meaningful; biases and
        # PReLU alphas are per-column so those blocks get the right values.
        y = jnp.dot(h.astype(jnp.bfloat16), w_ref[...],
                    preferred_element_type=jnp.float32) + b_ref[...]
        if a_ref is not None:
            y = _prelu(y, a_ref[...])
        return y

    def repack(y):
        # Keep the two diagonal blocks, re-stack on the row axis.
        n = y.shape[1] // 2
        return jnp.concatenate([y[:tb, :n], y[tb:, n:]], axis=0)

    hs = repack(fused_layer(hs, w2_ref, b2_ref, a2_ref))    # (2tb, 128)
    hs = repack(fused_layer(hs, w3_ref, b3_ref, a3_ref))    # (2tb, 64)
    hs = repack(fused_layer(hs, w4_ref, b4_ref, a4_ref))    # (2tb, 32)
    y5 = fused_layer(hs, w5_ref, b5_ref, None)              # (2tb, 2L)

    # --- Single full-block store: cols [:L] from the mu rows, [L:] from the ls rows.
    two_l = out_ref.shape[1]
    col = lax.broadcasted_iota(jnp.int32, (tb, two_l), 1)
    out_ref[...] = jnp.where(col < two_l // 2, y5[:tb, :], y5[tb:, :])


def prior_net_forward(y, packed_params):
    """PriorNet.forward: returns (mu, log_sigma_pow2). One fused pallas_call."""
    (w1, b1, a1, w2, b2, a2, w3, b3, a3, w4, b4, a4, w5, b5) = packed_params
    B, cond = y.shape
    latent = w5.shape[1] // 2

    # Batch tile (multiple of 8); pad batch so the grid divides evenly.
    if B <= 128:
        TB = ((B + 7) // 8) * 8
    else:
        TB = 128
    Bp = ((B + TB - 1) // TB) * TB
    if Bp != B:
        y = jnp.pad(y, ((0, Bp - B), (0, 0)))
    grid = (Bp // TB,)

    x_spec = pl.BlockSpec((TB, cond), lambda i: (i, 0))
    param_specs = [pl.BlockSpec(p.shape, lambda i: (0, 0)) for p in packed_params]
    out_spec = pl.BlockSpec((TB, 2 * latent), lambda i: (i, 0))

    # Advisory cost estimate so XLA can overlap this tiny custom call.
    flops = int(2 * Bp * w1.size + 2 * (2 * Bp) * (w2.size + w3.size + w4.size + w5.size))
    param_bytes = sum(int(p.size) * p.dtype.itemsize for p in packed_params)
    bytes_accessed = int(param_bytes
                         + y.size * y.dtype.itemsize
                         + Bp * 2 * latent * 4)
    cost = pl.CostEstimate(flops=flops, transcendentals=0,
                           bytes_accessed=bytes_accessed)

    out = pl.pallas_call(
        _prior_kernel,
        out_shape=jax.ShapeDtypeStruct((Bp, 2 * latent), jnp.float32),
        grid=grid,
        in_specs=[x_spec] + param_specs,
        out_specs=out_spec,
        compiler_params=pltpu.CompilerParams(dimension_semantics=("parallel",)),
        cost_estimate=cost,
    )(y, *packed_params)

    out = out[:B]
    return out[:, :latent], out[:, latent:]


# ----------------------------------------------------------------------------
# Parameter construction & packing.
# Weights pre-transposed (in, out) and cast to bf16; biases / PReLU stay f32.
# (Mimics PyTorch default Linear init: U(-1/sqrt(fan_in), 1/sqrt(fan_in)).)
# ----------------------------------------------------------------------------
def _init_branch(key, cond_size, latent_size):
    sizes = [cond_size, 256, 128, 64, 32, latent_size]
    ws, bs = [], []
    for i in range(5):
        fan_in, fan_out = sizes[i], sizes[i + 1]
        key, kw, kb = jax.random.split(key, 3)
        bound = 1.0 / float(fan_in) ** 0.5
        ws.append(jax.random.uniform(kw, (fan_in, fan_out), jnp.float32, -bound, bound))
        bs.append(jax.random.uniform(kb, (1, fan_out), jnp.float32, -bound, bound))
    prelu = jnp.full((4,), 0.25, dtype=jnp.float32)
    return (ws, bs, prelu), key


def pack_prior_params(mu_branch, ls_branch):
    """Pack both branches for the fused kernel.

    Per layer: weights concatenated along the output axis (K, 2N) in bf16;
    biases concatenated to (1, 2N) f32; PReLU alphas broadcast per-column to
    (1, 2N) f32 (layers 1-4 only).
    """
    mw, mb, ma = mu_branch
    sw, sb, sa = ls_branch
    packed = []
    for i in range(5):
        packed.append(jnp.concatenate([mw[i], sw[i]], axis=1).astype(jnp.bfloat16))
        packed.append(jnp.concatenate([mb[i], sb[i]], axis=1))
        if i < 4:
            n = mw[i].shape[1]
            alpha = jnp.concatenate(
                [jnp.full((1, n), ma[i], dtype=jnp.float32),
                 jnp.full((1, n), sa[i], dtype=jnp.float32)], axis=1)
            packed.append(alpha)
    return tuple(packed)


# ----------------------------------------------------------------------------
# Pure-JAX reference (same bf16 weights + bf16 LHS, f32 accumulation).
# ----------------------------------------------------------------------------
def _ref_branch(x, branch):
    ws, bs, prelu = branch
    h = x
    for i in range(5):
        w = ws[i].astype(jnp.bfloat16)
        h = jnp.dot(h.astype(jnp.bfloat16), w,
                    preferred_element_type=jnp.float32) + bs[i]
        if i < 4:
            h = _prelu(h, prelu[i])
    return h


if __name__ == "__main__":
    B = 8
    COND_SIZE = 32
    LATENT_SIZE = 8

    key = jax.random.PRNGKey(0)
    key, kx = jax.random.split(key)
    y = jax.random.normal(kx, (B, COND_SIZE), dtype=jnp.float32)

    mu_branch, key = _init_branch(key, COND_SIZE, LATENT_SIZE)
    ls_branch, key = _init_branch(key, COND_SIZE, LATENT_SIZE)
    packed = pack_prior_params(mu_branch, ls_branch)

    fwd = jax.jit(prior_net_forward)
    mu, log_sigma_pow2 = fwd(y, packed)
    jax.block_until_ready((mu, log_sigma_pow2))

    # correctness check against pure-JAX reference (matched bf16 matmul path)
    mu_ref = _ref_branch(y, mu_branch)
    ls_ref = _ref_branch(y, ls_branch)
    assert mu.shape == (B, LATENT_SIZE)
    assert log_sigma_pow2.shape == (B, LATENT_SIZE)
    assert jnp.allclose(mu, mu_ref, atol=2e-3, rtol=2e-3)
    assert jnp.allclose(log_sigma_pow2, ls_ref, atol=2e-3, rtol=2e-3)

    print("KERNEL_OK")
</pallas_src>

<mosaic_0001>
module attributes {stable_mosaic.version = 11 : i64} {
  func.func @_prior_kernel(%arg0: i32, %arg1: memref<8x32xf32, #tpu.memory_space<vmem>>, %arg2: memref<32x512xbf16, #tpu.memory_space<vmem>>, %arg3: memref<1x512xf32, #tpu.memory_space<vmem>>, %arg4: memref<1x512xf32, #tpu.memory_space<vmem>>, %arg5: memref<256x256xbf16, #tpu.memory_space<vmem>>, %arg6: memref<1x256xf32, #tpu.memory_space<vmem>>, %arg7: memref<1x256xf32, #tpu.memory_space<vmem>>, %arg8: memref<128x128xbf16, #tpu.memory_space<vmem>>, %arg9: memref<1x128xf32, #tpu.memory_space<vmem>>, %arg10: memref<1x128xf32, #tpu.memory_space<vmem>>, %arg11: memref<64x64xbf16, #tpu.memory_space<vmem>>, %arg12: memref<1x64xf32, #tpu.memory_space<vmem>>, %arg13: memref<1x64xf32, #tpu.memory_space<vmem>>, %arg14: memref<32x16xbf16, #tpu.memory_space<vmem>>, %arg15: memref<1x16xf32, #tpu.memory_space<vmem>>, %arg16: memref<8x16xf32, #tpu.memory_space<vmem>>) attributes {dimension_semantics = [#tpu.dimension_semantics<parallel>], iteration_bounds = array<i64: 1>, scalar_prefetch = 0 : i64, scratch_operands = 0 : i64, tpu.core_type = #tpu.core_type<tc>, window_params = [{transform_indices = @transform_0, window_bounds = array<i64: 8, 32>}, {pipeline_mode = #tpu.pipeline_mode<synchronous>, transform_indices = @transform_1, window_bounds = array<i64: 32, 512>}, {pipeline_mode = #tpu.pipeline_mode<synchronous>, transform_indices = @transform_2, window_bounds = array<i64: 1, 512>}, {pipeline_mode = #tpu.pipeline_mode<synchronous>, transform_indices = @transform_3, window_bounds = array<i64: 1, 512>}, {pipeline_mode = #tpu.pipeline_mode<synchronous>, transform_indices = @transform_4, window_bounds = array<i64: 256, 256>}, {pipeline_mode = #tpu.pipeline_mode<synchronous>, transform_indices = @transform_5, window_bounds = array<i64: 1, 256>}, {pipeline_mode = #tpu.pipeline_mode<synchronous>, transform_indices = @transform_6, window_bounds = array<i64: 1, 256>}, {pipeline_mode = #tpu.pipeline_mode<synchronous>, transform_indices = @transform_7, window_bounds = array<i64: 128, 128>}, {pipeline_mode = #tpu.pipeline_mode<synchronous>, transform_indices = @transform_8, window_bounds = array<i64: 1, 128>}, {pipeline_mode = #tpu.pipeline_mode<synchronous>, transform_indices = @transform_9, window_bounds = array<i64: 1, 128>}, {pipeline_mode = #tpu.pipeline_mode<synchronous>, transform_indices = @transform_10, window_bounds = array<i64: 64, 64>}, {pipeline_mode = #tpu.pipeline_mode<synchronous>, transform_indices = @transform_11, window_bounds = array<i64: 1, 64>}, {pipeline_mode = #tpu.pipeline_mode<synchronous>, transform_indices = @transform_12, window_bounds = array<i64: 1, 64>}, {pipeline_mode = #tpu.pipeline_mode<synchronous>, transform_indices = @transform_13, window_bounds = array<i64: 32, 16>}, {pipeline_mode = #tpu.pipeline_mode<synchronous>, transform_indices = @transform_14, window_bounds = array<i64: 1, 16>}, {transform_indices = @transform_15, window_bounds = array<i64: 8, 16>}]} {
    %c0 = arith.constant 0 : index
    %c0_0 = arith.constant 0 : index
    %0 = vector.load %arg1[%c0, %c0_0] : memref<8x32xf32, #tpu.memory_space<vmem>>, vector<8x32xf32>
    %1 = arith.truncf %0 : vector<8x32xf32> to vector<8x32xbf16>
    %c0_1 = arith.constant 0 : index
    %c0_2 = arith.constant 0 : index
    %2 = vector.load %arg2[%c0_1, %c0_2] : memref<32x512xbf16, #tpu.memory_space<vmem>>, vector<32x512xbf16>
    %cst = arith.constant dense<0.000000e+00> : vector<8x512xf32>
    %3 = tpu.matmul %1, %2, %cst {dimension_numbers = #tpu.dot_dimension_numbers<[1], [0], [0], [1], [0, 0, 1, 1], [], []>} : vector<8x32xbf16>, vector<32x512xbf16>, vector<8x512xf32> -> vector<8x512xf32>
    %c0_3 = arith.constant 0 : index
    %c0_4 = arith.constant 0 : index
    %4 = vector.load %arg3[%c0_3, %c0_4] : memref<1x512xf32, #tpu.memory_space<vmem>>, vector<1x512xf32>
    %5 = vector.broadcast %4 : vector<1x512xf32> to vector<8x512xf32>
    %6 = arith.addf %3, %5 : vector<8x512xf32>
    %c0_5 = arith.constant 0 : index
    %c0_6 = arith.constant 0 : index
    %7 = vector.load %arg4[%c0_5, %c0_6] : memref<1x512xf32, #tpu.memory_space<vmem>>, vector<1x512xf32>
    %cst_7 = arith.constant 0.000000e+00 : f32
    %8 = vector.broadcast %cst_7 : f32 to vector<8x512xf32>
    %9 = arith.cmpf ogt, %6, %8 : vector<8x512xf32>
    %10 = vector.broadcast %7 : vector<1x512xf32> to vector<8x512xf32>
    %11 = arith.mulf %10, %6 : vector<8x512xf32>
    %12 = arith.select %9, %6, %11 : vector<8x512xi1>, vector<8x512xf32>
    %13 = vector.extract_strided_slice %12 {offsets = [0, 0], sizes = [8, 256], strides = [1, 1]} : vector<8x512xf32> to vector<8x256xf32>
    %14 = vector.extract_strided_slice %12 {offsets = [0, 256], sizes = [8, 256], strides = [1, 1]} : vector<8x512xf32> to vector<8x256xf32>
    %15 = tpu.concatenate %13, %14 in 0 : vector<8x256xf32>, vector<8x256xf32> -> vector<16x256xf32>
    %16 = arith.truncf %15 : vector<16x256xf32> to vector<16x256xbf16>
    %c0_8 = arith.constant 0 : index
    %c0_9 = arith.constant 0 : index
    %17 = vector.load %arg5[%c0_8, %c0_9] : memref<256x256xbf16, #tpu.memory_space<vmem>>, vector<256x256xbf16>
    %cst_10 = arith.constant dense<0.000000e+00> : vector<16x256xf32>
    %18 = tpu.matmul %16, %17, %cst_10 {dimension_numbers = #tpu.dot_dimension_numbers<[1], [0], [0], [1], [0, 0, 1, 1], [], []>} : vector<16x256xbf16>, vector<256x256xbf16>, vector<16x256xf32> -> vector<16x256xf32>
    %c0_11 = arith.constant 0 : index
    %c0_12 = arith.constant 0 : index
    %19 = vector.load %arg6[%c0_11, %c0_12] : memref<1x256xf32, #tpu.memory_space<vmem>>, vector<1x256xf32>
    %20 = vector.broadcast %19 : vector<1x256xf32> to vector<16x256xf32>
    %21 = arith.addf %18, %20 : vector<16x256xf32>
    %c0_13 = arith.constant 0 : index
    %c0_14 = arith.constant 0 : index
    %22 = vector.load %arg7[%c0_13, %c0_14] : memref<1x256xf32, #tpu.memory_space<vmem>>, vector<1x256xf32>
    %cst_15 = arith.constant 0.000000e+00 : f32
    %23 = vector.broadcast %cst_15 : f32 to vector<16x256xf32>
    %24 = arith.cmpf ogt, %21, %23 : vector<16x256xf32>
    %25 = vector.broadcast %22 : vector<1x256xf32> to vector<16x256xf32>
    %26 = arith.mulf %25, %21 : vector<16x256xf32>
    %27 = arith.select %24, %21, %26 : vector<16x256xi1>, vector<16x256xf32>
    %28 = vector.extract_strided_slice %27 {offsets = [0, 0], sizes = [8, 128], strides = [1, 1]} : vector<16x256xf32> to vector<8x128xf32>
    %29 = vector.extract_strided_slice %27 {offsets = [8, 128], sizes = [8, 128], strides = [1, 1]} : vector<16x256xf32> to vector<8x128xf32>
    %30 = tpu.concatenate %28, %29 in 0 : vector<8x128xf32>, vector<8x128xf32> -> vector<16x128xf32>
    %31 = arith.truncf %30 : vector<16x128xf32> to vector<16x128xbf16>
    %c0_16 = arith.constant 0 : index
    %c0_17 = arith.constant 0 : index
    %32 = vector.load %arg8[%c0_16, %c0_17] : memref<128x128xbf16, #tpu.memory_space<vmem>>, vector<128x128xbf16>
    %cst_18 = arith.constant dense<0.000000e+00> : vector<16x128xf32>
    %33 = tpu.matmul %31, %32, %cst_18 {dimension_numbers = #tpu.dot_dimension_numbers<[1], [0], [0], [1], [0, 0, 1, 1], [], []>} : vector<16x128xbf16>, vector<128x128xbf16>, vector<16x128xf32> -> vector<16x128xf32>
    %c0_19 = arith.constant 0 : index
    %c0_20 = arith.constant 0 : index
    %34 = vector.load %arg9[%c0_19, %c0_20] : memref<1x128xf32, #tpu.memory_space<vmem>>, vector<1x128xf32>
    %35 = vector.broadcast %34 : vector<1x128xf32> to vector<16x128xf32>
    %36 = arith.addf %33, %35 : vector<16x128xf32>
    %c0_21 = arith.constant 0 : index
    %c0_22 = arith.constant 0 : index
    %37 = vector.load %arg10[%c0_21, %c0_22] : memref<1x128xf32, #tpu.memory_space<vmem>>, vector<1x128xf32>
    %cst_23 = arith.constant 0.000000e+00 : f32
    %38 = vector.broadcast %cst_23 : f32 to vector<16x128xf32>
    %39 = arith.cmpf ogt, %36, %38 : vector<16x128xf32>
    %40 = vector.broadcast %37 : vector<1x128xf32> to vector<16x128xf32>
    %41 = arith.mulf %40, %36 : vector<16x128xf32>
    %42 = arith.select %39, %36, %41 : vector<16x128xi1>, vector<16x128xf32>
    %43 = vector.extract_strided_slice %42 {offsets = [0, 0], sizes = [8, 64], strides = [1, 1]} : vector<16x128xf32> to vector<8x64xf32>
    %44 = vector.extract_strided_slice %42 {offsets = [8, 64], sizes = [8, 64], strides = [1, 1]} : vector<16x128xf32> to vector<8x64xf32>
    %45 = tpu.concatenate %43, %44 in 0 : vector<8x64xf32>, vector<8x64xf32> -> vector<16x64xf32>
    %46 = arith.truncf %45 : vector<16x64xf32> to vector<16x64xbf16>
    %c0_24 = arith.constant 0 : index
    %c0_25 = arith.constant 0 : index
    %47 = vector.load %arg11[%c0_24, %c0_25] : memref<64x64xbf16, #tpu.memory_space<vmem>>, vector<64x64xbf16>
    %cst_26 = arith.constant dense<0.000000e+00> : vector<16x64xf32>
    %48 = tpu.matmul %46, %47, %cst_26 {dimension_numbers = #tpu.dot_dimension_numbers<[1], [0], [0], [1], [0, 0, 1, 1], [], []>} : vector<16x64xbf16>, vector<64x64xbf16>, vector<16x64xf32> -> vector<16x64xf32>
    %c0_27 = arith.constant 0 : index
    %c0_28 = arith.constant 0 : index
    %49 = vector.load %arg12[%c0_27, %c0_28] : memref<1x64xf32, #tpu.memory_space<vmem>>, vector<1x64xf32>
    %50 = vector.broadcast %49 : vector<1x64xf32> to vector<16x64xf32>
    %51 = arith.addf %48, %50 : vector<16x64xf32>
    %c0_29 = arith.constant 0 : index
    %c0_30 = arith.constant 0 : index
    %52 = vector.load %arg13[%c0_29, %c0_30] : memref<1x64xf32, #tpu.memory_space<vmem>>, vector<1x64xf32>
    %cst_31 = arith.constant 0.000000e+00 : f32
    %53 = vector.broadcast %cst_31 : f32 to vector<16x64xf32>
    %54 = arith.cmpf ogt, %51, %53 : vector<16x64xf32>
    %55 = vector.broadcast %52 : vector<1x64xf32> to vector<16x64xf32>
    %56 = arith.mulf %55, %51 : vector<16x64xf32>
    %57 = arith.select %54, %51, %56 : vector<16x64xi1>, vector<16x64xf32>
    %58 = vector.extract_strided_slice %57 {offsets = [0, 0], sizes = [8, 32], strides = [1, 1]} : vector<16x64xf32> to vector<8x32xf32>
    %59 = vector.extract_strided_slice %57 {offsets = [8, 32], sizes = [8, 32], strides = [1, 1]} : vector<16x64xf32> to vector<8x32xf32>
    %60 = tpu.concatenate %58, %59 in 0 : vector<8x32xf32>, vector<8x32xf32> -> vector<16x32xf32>
    %61 = arith.truncf %60 : vector<16x32xf32> to vector<16x32xbf16>
    %c0_32 = arith.constant 0 : index
    %c0_33 = arith.constant 0 : index
    %62 = vector.load %arg14[%c0_32, %c0_33] : memref<32x16xbf16, #tpu.memory_space<vmem>>, vector<32x16xbf16>
    %cst_34 = arith.constant dense<0.000000e+00> : vector<16x16xf32>
    %63 = tpu.matmul %61, %62, %cst_34 {dimension_numbers = #tpu.dot_dimension_numbers<[1], [0], [0], [1], [0, 0, 1, 1], [], []>} : vector<16x32xbf16>, vector<32x16xbf16>, vector<16x16xf32> -> vector<16x16xf32>
    %c0_35 = arith.constant 0 : index
    %c0_36 = arith.constant 0 : index
    %64 = vector.load %arg15[%c0_35, %c0_36] : memref<1x16xf32, #tpu.memory_space<vmem>>, vector<1x16xf32>
    %65 = vector.broadcast %64 : vector<1x16xf32> to vector<16x16xf32>
    %66 = arith.addf %63, %65 : vector<16x16xf32>
    %67 = tpu.iota {dimensions = array<i32: 1>} : vector<8x16xi32>
    %c8_i32 = arith.constant 8 : i32
    %68 = vector.broadcast %c8_i32 : i32 to vector<8x16xi32>
    %69 = arith.cmpi slt, %67, %68 : vector<8x16xi32>
    %70 = vector.extract_strided_slice %66 {offsets = [0, 0], sizes = [8, 16], strides = [1, 1]} : vector<16x16xf32> to vector<8x16xf32>
    %71 = vector.extract_strided_slice %66 {offsets = [8, 0], sizes = [8, 16], strides = [1, 1]} : vector<16x16xf32> to vector<8x16xf32>
    %72 = arith.select %69, %70, %71 : vector<8x16xi1>, vector<8x16xf32>
    %c0_37 = arith.constant 0 : index
    %c0_38 = arith.constant 0 : index
    %73 = vector.load %arg16[%c0_37, %c0_38] : memref<8x16xf32, #tpu.memory_space<vmem>>, vector<8x16xf32>
    tpu.vector_store %arg16[%c0_37, %c0_38], %72 {strides = array<i32>} : memref<8x16xf32, #tpu.memory_space<vmem>>, vector<8x16xf32>,
    return
  }
  func.func @transform_0(%arg0: i32) -> (i32, i32) {
    %c0_i32 = arith.constant 0 : i32
    %c0_i32_0 = arith.constant 0 : i32
    return %arg0, %c0_i32 : i32, i32
  }
  func.func @transform_1(%arg0: i32) -> (i32, i32) {
    %c0_i32 = arith.constant 0 : i32
    %c0_i32_0 = arith.constant 0 : i32
    %c0_i32_1 = arith.constant 0 : i32
    return %c0_i32, %c0_i32_0 : i32, i32
  }
  func.func @transform_2(%arg0: i32) -> (i32, i32) {
    %c0_i32 = arith.constant 0 : i32
    %c0_i32_0 = arith.constant 0 : i32
    %c0_i32_1 = arith.constant 0 : i32
    return %c0_i32, %c0_i32_0 : i32, i32
  }
  func.func @transform_3(%arg0: i32) -> (i32, i32) {
    %c0_i32 = arith.constant 0 : i32
    %c0_i32_0 = arith.constant 0 : i32
    %c0_i32_1 = arith.constant 0 : i32
    return %c0_i32, %c0_i32_0 : i32, i32
  }
  func.func @transform_4(%arg0: i32) -> (i32, i32) {
    %c0_i32 = arith.constant 0 : i32
    %c0_i32_0 = arith.constant 0 : i32
    %c0_i32_1 = arith.constant 0 : i32
    return %c0_i32, %c0_i32_0 : i32, i32
  }
  func.func @transform_5(%arg0: i32) -> (i32, i32) {
    %c0_i32 = arith.constant 0 : i32
    %c0_i32_0 = arith.constant 0 : i32
    %c0_i32_1 = arith.constant 0 : i32
    return %c0_i32, %c0_i32_0 : i32, i32
  }
  func.func @transform_6(%arg0: i32) -> (i32, i32) {
    %c0_i32 = arith.constant 0 : i32
    %c0_i32_0 = arith.constant 0 : i32
    %c0_i32_1 = arith.constant 0 : i32
    return %c0_i32, %c0_i32_0 : i32, i32
  }
  func.func @transform_7(%arg0: i32) -> (i32, i32) {
    %c0_i32 = arith.constant 0 : i32
    %c0_i32_0 = arith.constant 0 : i32
    %c0_i32_1 = arith.constant 0 : i32
    return %c0_i32, %c0_i32_0 : i32, i32
  }
  func.func @transform_8(%arg0: i32) -> (i32, i32) {
    %c0_i32 = arith.constant 0 : i32
    %c0_i32_0 = arith.constant 0 : i32
    %c0_i32_1 = arith.constant 0 : i32
    return %c0_i32, %c0_i32_0 : i32, i32
  }
  func.func @transform_9(%arg0: i32) -> (i32, i32) {
    %c0_i32 = arith.constant 0 : i32
    %c0_i32_0 = arith.constant 0 : i32
    %c0_i32_1 = arith.constant 0 : i32
    return %c0_i32, %c0_i32_0 : i32, i32
  }
  func.func @transform_10(%arg0: i32) -> (i32, i32) {
    %c0_i32 = arith.constant 0 : i32
    %c0_i32_0 = arith.constant 0 : i32
    %c0_i32_1 = arith.constant 0 : i32
    return %c0_i32, %c0_i32_0 : i32, i32
  }
  func.func @transform_11(%arg0: i32) -> (i32, i32) {
    %c0_i32 = arith.constant 0 : i32
    %c0_i32_0 = arith.constant 0 : i32
    %c0_i32_1 = arith.constant 0 : i32
    return %c0_i32, %c0_i32_0 : i32, i32
  }
  func.func @transform_12(%arg0: i32) -> (i32, i32) {
    %c0_i32 = arith.constant 0 : i32
    %c0_i32_0 = arith.constant 0 : i32
    %c0_i32_1 = arith.constant 0 : i32
    return %c0_i32, %c0_i32_0 : i32, i32
  }
  func.func @transform_13(%arg0: i32) -> (i32, i32) {
    %c0_i32 = arith.constant 0 : i32
    %c0_i32_0 = arith.constant 0 : i32
    %c0_i32_1 = arith.constant 0 : i32
    return %c0_i32, %c0_i32_0 : i32, i32
  }
  func.func @transform_14(%arg0: i32) -> (i32, i32) {
    %c0_i32 = arith.constant 0 : i32
    %c0_i32_0 = arith.constant 0 : i32
    %c0_i32_1 = arith.constant 0 : i32
    return %c0_i32, %c0_i32_0 : i32, i32
  }
  func.func @transform_15(%arg0: i32) -> (i32, i32) {
    %c0_i32 = arith.constant 0 : i32
    %c0_i32_0 = arith.constant 0 : i32
    return %arg0, %c0_i32 : i32, i32
  }
}

</mosaic_0001>

<llo_original>
// kernel: prior_net_forward.1
$region0: #{prior_net_forward.1}
  #allocation0 [shape = 'u32[]', space=smem, size = 0x4, offset = 0x4, fixed_abs, tag = 'smem constant byte address 0x4 - core index']
  #allocation1 [shape = 'u32[72,128]{1,0:T(1,128)}', space=vmem, size = 0x9000, scoped, tag = 'internal scratch']
  %s0 = inlined_call_operand.hbm [shape: f32[8,32], index: 0, kind: input, shape index: {}]
  %s1 = inlined_call_operand.hbm [shape: bf16[32,512], index: 1, kind: input, shape index: {}]
  %s2 = inlined_call_operand.hbm [shape: f32[1,512], index: 2, kind: input, shape index: {}]
  %s3 = inlined_call_operand.hbm [shape: f32[1,512], index: 3, kind: input, shape index: {}]
  %s4 = inlined_call_operand.hbm [shape: bf16[256,256], index: 4, kind: input, shape index: {}]
  %s5 = inlined_call_operand.hbm [shape: f32[1,256], index: 5, kind: input, shape index: {}]
  %s6 = inlined_call_operand.hbm [shape: f32[1,256], index: 6, kind: input, shape index: {}]
  %s7 = inlined_call_operand.hbm [shape: bf16[128,128], index: 7, kind: input, shape index: {}]
  %s8 = inlined_call_operand.vmem [shape: f32[1,128], index: 8, kind: input, shape index: {}]
  %s9 = inlined_call_operand.hbm [shape: f32[1,128], index: 9, kind: input, shape index: {}]
  %s10 = inlined_call_operand.vmem [shape: bf16[64,64], index: 10, kind: input, shape index: {}]
  %s11 = inlined_call_operand.vmem [shape: f32[1,64], index: 11, kind: input, shape index: {}]
  %s12 = inlined_call_operand.vmem [shape: f32[1,64], index: 12, kind: input, shape index: {}]
  %s13 = inlined_call_operand.vmem [shape: bf16[32,16], index: 13, kind: input, shape index: {}]
  %s14 = inlined_call_operand.vmem [shape: f32[1,16], index: 14, kind: input, shape index: {}]
  %s15 = inlined_call_operand.vmem [shape: f32[8,16], index: 15, kind: output, shape index: {}]
  %s16 = sld [smem:[#allocation0]]
  $region106: #{prior_net_forward.1} parent=0
    _
  %s18 = ssub.s32 1, %s16
  %s19 = scalar_select 0, %s18, %s16
  $region1: #{prior_net_forward.1} parent=0
    #allocation2 [shape = 'u8[4096]{0}', space=vmem, size = 0x1000, scoped, tag = 'input window, operand 0, single buffered']
    #allocation3 [shape = 's32[1]{0}', space=sflag, size = 0x4, scoped, tag = 'scoped memory for prior_net_forward.1']
    #allocation4 [shape = 'u8[32768]{0}', space=vmem, size = 0x8000, scoped, tag = 'input window, operand 1, single buffered']
    #allocation5 [shape = 's32[1]{0}', space=sflag, size = 0x4, scoped, tag = 'scoped memory for prior_net_forward.1']
    #allocation6 [shape = 'u8[2048]{0}', space=vmem, size = 0x800, scoped, tag = 'input window, operand 2, single buffered']
    #allocation7 [shape = 'u8[2048]{0}', space=vmem, size = 0x800, scoped, tag = 'input window, operand 3, single buffered']
    #allocation8 [shape = 's32[1]{0}', space=sflag, size = 0x4, scoped, tag = 'scoped memory for prior_net_forward.1']
    #allocation9 [shape = 'u8[131072]{0}', space=vmem, size = 0x20000, scoped, tag = 'input window, operand 4, single buffered']
    #allocation10 [shape = 'u8[1024]{0}', space=vmem, size = 0x400, scoped, tag = 'input window, operand 5, single buffered']
    #allocation11 [shape = 's32[1]{0}', space=sflag, size = 0x4, scoped, tag = 'scoped memory for prior_net_forward.1']
    #allocation12 [shape = 'u8[1024]{0}', space=vmem, size = 0x400, scoped, tag = 'input window, operand 6, single buffered']
    #allocation13 [shape = 'u8[32768]{0}', space=vmem, size = 0x8000, scoped, tag = 'input window, operand 7, single buffered']
    #allocation14 [shape = 's32[1]{0}', space=sflag, size = 0x4, scoped, tag = 'scoped memory for prior_net_forward.1']
    #allocation15 [shape = 'u8[512]{0}', space=vmem, size = 0x400, scoped, tag = 'input window, operand 9, single buffered']
    %20 = vsyncpa [#allocation3], 0
    %21 = vsyncpa [#allocation5], 0
    %22 = vsyncpa [#allocation8], 0
    %23 = vsyncpa [#allocation11], 0
    %24 = vsyncpa [#allocation14], 0
    // Predicated region
    $region2: #{prior_net_forward.1} parent=1 // pred_check
      _
    $region3: #{prior_net_forward.1} parent=1 // pred_check_branch
      %26 = sbr.rel (0) target = $region5
    $region4: #{prior_net_forward.1} parent=1 // pred_region
      %28 = vsyncadd [#allocation3], 0
      %s30 = sshll.u32 %s0, 4
      %s31 = int_to_ptr.hbm [resolvable:$true] %s30
      %s32 = sshll.u32 [#allocation2], 4
      %s33 = int_to_ptr.vmem [resolvable:$true] %s32
      %35 = dma.hbm_to_vmem [thread:$0]  %s31, 128, %s33, [#allocation3]
    $region5: #{prior_net_forward.1} parent=1 // pred_fallthru
      _
    // Predicated region
    $region6: #{prior_net_forward.1} parent=1 // pred_check
      _
    $region7: #{prior_net_forward.1} parent=1 // pred_check_branch
      %37 = sbr.rel (0) target = $region9
    $region8: #{prior_net_forward.1} parent=1 // pred_region
      %39 = vsyncadd [#allocation5], 0
      %s40 = sshll.u32 %s1, 4
      %s41 = int_to_ptr.hbm [resolvable:$true] %s40
      %s42 = sshll.u32 [#allocation4], 4
      %s43 = int_to_ptr.vmem [resolvable:$true] %s42
      %48 = dma.hbm_to_vmem [thread:$0]  %s41, 1024, %s43, [#allocation5], 256, 256, 16
    $region9: #{prior_net_forward.1} parent=1 // pred_fallthru
      _
    // Predicated region
    $region10: #{prior_net_forward.1} parent=1 // pred_check
      _
    $region11: #{prior_net_forward.1} parent=1 // pred_check_branch
      %50 = sbr.rel (0) target = $region13
    $region12: #{prior_net_forward.1} parent=1 // pred_region
      %52 = vsyncadd [#allocation5], 0
      %s54 = sshll.u32 %s2, 4
      %s55 = int_to_ptr.hbm [resolvable:$true] %s54
      %s56 = sshll.u32 [#allocation6], 4
      %s57 = int_to_ptr.vmem [resolvable:$true] %s56
      %59 = dma.hbm_to_vmem [thread:$0]  %s55, 64, %s57, [#allocation5]
    $region13: #{prior_net_forward.1} parent=1 // pred_fallthru
      _
    // Predicated region
    $region14: #{prior_net_forward.1} parent=1 // pred_check
      _
    $region15: #{prior_net_forward.1} parent=1 // pred_check_branch
      %61 = sbr.rel (0) target = $region17
    $region16: #{prior_net_forward.1} parent=1 // pred_region
      %63 = vsyncadd [#allocation8], 0
      %s65 = sshll.u32 %s3, 4
      %s66 = int_to_ptr.hbm [resolvable:$true] %s65
      %s67 = sshll.u32 [#allocation7], 4
      %s68 = int_to_ptr.vmem [resolvable:$true] %s67
      %70 = dma.hbm_to_vmem [thread:$0]  %s66, 64, %s68, [#allocation8]
    $region17: #{prior_net_forward.1} parent=1 // pred_fallthru
      _
    // Predicated region
    $region18: #{prior_net_forward.1} parent=1 // pred_check
      _
    $region19: #{prior_net_forward.1} parent=1 // pred_check_branch
      %72 = sbr.rel (0) target = $region21
    $region20: #{prior_net_forward.1} parent=1 // pred_region
      %74 = vsyncadd [#allocation8], 0
      %s75 = sshll.u32 %s4, 4
      %s76 = int_to_ptr.hbm [resolvable:$true] %s75
      %s77 = sshll.u32 [#allocation9], 4
      %s78 = int_to_ptr.vmem [resolvable:$true] %s77
      %83 = dma.hbm_to_vmem [thread:$0]  %s76, 4096, %s78, [#allocation8], 128, 128, 8
    $region21: #{prior_net_forward.1} parent=1 // pred_fallthru
      _
    // Predicated region
    $region22: #{prior_net_forward.1} parent=1 // pred_check
      _
    $region23: #{prior_net_forward.1} parent=1 // pred_check_branch
      %85 = sbr.rel (0) target = $region25
    $region24: #{prior_net_forward.1} parent=1 // pred_region
      %87 = vsyncadd [#allocation11], 0
      %s89 = sshll.u32 %s5, 4
      %s90 = int_to_ptr.hbm [resolvable:$true] %s89
      %s91 = sshll.u32 [#allocation10], 4
      %s92 = int_to_ptr.vmem [resolvable:$true] %s91
      %94 = dma.hbm_to_vmem [thread:$0]  %s90, 32, %s92, [#allocation11]
    $region25: #{prior_net_forward.1} parent=1 // pred_fallthru
      _
    // Predicated region
    $region26: #{prior_net_forward.1} parent=1 // pred_check
      _
    $region27: #{prior_net_forward.1} parent=1 // pred_check_branch
      %96 = sbr.rel (0) target = $region29
    $region28: #{prior_net_forward.1} parent=1 // pred_region
      %98 = vsyncadd [#allocation11], 0
      %s100 = sshll.u32 %s6, 4
      %s101 = int_to_ptr.hbm [resolvable:$true] %s100
      %s102 = sshll.u32 [#allocation12], 4
      %s103 = int_to_ptr.vmem [resolvable:$true] %s102
      %105 = dma.hbm_to_vmem [thread:$0]  %s101, 32, %s103, [#allocation11]
    $region29: #{prior_net_forward.1} parent=1 // pred_fallthru
      _
    // Predicated region
    $region30: #{prior_net_forward.1} parent=1 // pred_check
      _
    $region31: #{prior_net_forward.1} parent=1 // pred_check_branch
      %107 = sbr.rel (0) target = $region33
    $region32: #{prior_net_forward.1} parent=1 // pred_region
      %109 = vsyncadd [#allocation14], 0
      %s110 = sshll.u32 %s7, 4
      %s111 = int_to_ptr.hbm [resolvable:$true] %s110
      %s112 = sshll.u32 [#allocation13], 4
      %s113 = int_to_ptr.vmem [resolvable:$true] %s112
      %118 = dma.hbm_to_vmem [thread:$0]  %s111, 1024, %s113, [#allocation14], 64, 64, 4
    $region33: #{prior_net_forward.1} parent=1 // pred_fallthru
      _
    // Predicated region
    $region34: #{prior_net_forward.1} parent=1 // pred_check
      _
    $region35: #{prior_net_forward.1} parent=1 // pred_check_branch
      %120 = sbr.rel (0) target = $region37
    $region36: #{prior_net_forward.1} parent=1 // pred_region
      _
    $region37: #{prior_net_forward.1} parent=1 // pred_fallthru
      _
    // Predicated region
    $region38: #{prior_net_forward.1} parent=1 // pred_check
      _
    $region39: #{prior_net_forward.1} parent=1 // pred_check_branch
      %122 = sbr.rel (0) target = $region41
    $region40: #{prior_net_forward.1} parent=1 // pred_region
      %124 = vsyncadd [#allocation14], 0
      %s126 = sshll.u32 %s9, 4
      %s127 = int_to_ptr.hbm [resolvable:$true] %s126
      %s128 = sshll.u32 [#allocation15], 4
      %s129 = int_to_ptr.vmem [resolvable:$true] %s128
      %131 = dma.hbm_to_vmem [thread:$0]  %s127, 16, %s129, [#allocation14]
    $region41: #{prior_net_forward.1} parent=1 // pred_fallthru
      _
    // Predicated region
    $region42: #{prior_net_forward.1} parent=1 // pred_check
      _
    $region43: #{prior_net_forward.1} parent=1 // pred_check_branch
      %133 = sbr.rel (0) target = $region45
    $region44: #{prior_net_forward.1} parent=1 // pred_region
      _
    $region45: #{prior_net_forward.1} parent=1 // pred_fallthru
      _
    // Predicated region
    $region46: #{prior_net_forward.1} parent=1 // pred_check
      _
    $region47: #{prior_net_forward.1} parent=1 // pred_check_branch
      %135 = sbr.rel (0) target = $region49
    $region48: #{prior_net_forward.1} parent=1 // pred_region
      _
    $region49: #{prior_net_forward.1} parent=1 // pred_fallthru
      _
    // Predicated region
    $region50: #{prior_net_forward.1} parent=1 // pred_check
      _
    $region51: #{prior_net_forward.1} parent=1 // pred_check_branch
      %137 = sbr.rel (0) target = $region53
    $region52: #{prior_net_forward.1} parent=1 // pred_region
      _
    $region53: #{prior_net_forward.1} parent=1 // pred_fallthru
      _
    // Predicated region
    $region54: #{prior_net_forward.1} parent=1 // pred_check
      _
    $region55: #{prior_net_forward.1} parent=1 // pred_check_branch
      %139 = sbr.rel (0) target = $region57
    $region56: #{prior_net_forward.1} parent=1 // pred_region
      _
    $region57: #{prior_net_forward.1} parent=1 // pred_fallthru
      _
    // Predicated region
    $region58: #{prior_net_forward.1} parent=1 // pred_check
      _
    $region59: #{prior_net_forward.1} parent=1 // pred_check_branch
      %141 = sbr.rel (0) target = $region61
    $region60: #{prior_net_forward.1} parent=1 // pred_region
      _
    $region61: #{prior_net_forward.1} parent=1 // pred_fallthru
      _
    // Predicated region
    $region62: #{prior_net_forward.1} parent=1 // pred_check
      _
    $region63: #{prior_net_forward.1} parent=1 // pred_check_branch
      %143 = sbr.rel (0) target = $region65
    $region64: #{prior_net_forward.1} parent=1 // pred_region
      %145 = dma.done [#allocation3], 128
    $region65: #{prior_net_forward.1} parent=1 // pred_fallthru
      _
    // Predicated region
    $region66: #{prior_net_forward.1} parent=1 // pred_check
      _
    $region67: #{prior_net_forward.1} parent=1 // pred_check_branch
      %147 = sbr.rel (0) target = $region69
    $region68: #{prior_net_forward.1} parent=1 // pred_region
      %149 = dma.done [#allocation5], 1024
    $region69: #{prior_net_forward.1} parent=1 // pred_fallthru
      _
    // Predicated region
    $region70: #{prior_net_forward.1} parent=1 // pred_check
      _
    $region71: #{prior_net_forward.1} parent=1 // pred_check_branch
      %151 = sbr.rel (0) target = $region73
    $region72: #{prior_net_forward.1} parent=1 // pred_region
      %153 = dma.done [#allocation5], 64
    $region73: #{prior_net_forward.1} parent=1 // pred_fallthru
      _
    // Predicated region
    $region74: #{prior_net_forward.1} parent=1 // pred_check
      _
    $region75: #{prior_net_forward.1} parent=1 // pred_check_branch
      %155 = sbr.rel (0) target = $region77
    $region76: #{prior_net_forward.1} parent=1 // pred_region
      %157 = dma.done [#allocation8], 64
    $region77: #{prior_net_forward.1} parent=1 // pred_fallthru
      _
    // Predicated region
    $region78: #{prior_net_forward.1} parent=1 // pred_check
      _
    $region79: #{prior_net_forward.1} parent=1 // pred_check_branch
      %159 = sbr.rel (0) target = $region81
    $region80: #{prior_net_forward.1} parent=1 // pred_region
      %161 = dma.done [#allocation8], 4096
    $region81: #{prior_net_forward.1} parent=1 // pred_fallthru
      _
    // Predicated region
    $region82: #{prior_net_forward.1} parent=1 // pred_check
      _
    $region83: #{prior_net_forward.1} parent=1 // pred_check_branch
      %163 = sbr.rel (0) target = $region85
    $region84: #{prior_net_forward.1} parent=1 // pred_region
      %165 = dma.done [#allocation11], 32
    $region85: #{prior_net_forward.1} parent=1 // pred_fallthru
      _
    // Predicated region
    $region86: #{prior_net_forward.1} parent=1 // pred_check
      _
    $region87: #{prior_net_forward.1} parent=1 // pred_check_branch
      %167 = sbr.rel (0) target = $region89
    $region88: #{prior_net_forward.1} parent=1 // pred_region
      %169 = dma.done [#allocation11], 32
    $region89: #{prior_net_forward.1} parent=1 // pred_fallthru
      _
    // Predicated region
    $region90: #{prior_net_forward.1} parent=1 // pred_check
      _
    $region91: #{prior_net_forward.1} parent=1 // pred_check_branch
      %171 = sbr.rel (0) target = $region93
    $region92: #{prior_net_forward.1} parent=1 // pred_region
      %173 = dma.done [#allocation14], 1024
    $region93: #{prior_net_forward.1} parent=1 // pred_fallthru
      _
    // Predicated region
    $region94: #{prior_net_forward.1} parent=1 // pred_check
      _
    $region95: #{prior_net_forward.1} parent=1 // pred_check_branch
      %175 = sbr.rel (0) target = $region97
    $region96: #{prior_net_forward.1} parent=1 // pred_region
      %177 = dma.done [#allocation14], 16
    $region97: #{prior_net_forward.1} parent=1 // pred_fallthru
      _
    %v179 = vld [vmem:[#allocation2] sm:$0xff]
    %v180 = vpack.c.bf16 %v179, %v179
    %v181 = vld [vmem:[#allocation4] sm:$0xff]
    %v182 = vld [vmem:[#allocation4 + $0x8] sm:$0xff]
    %v183 = vld [vmem:[#allocation4 + $0x10] sm:$0xff]
    %v184 = vld [vmem:[#allocation4 + $0x18] sm:$0xff]
    %v185 = vld [vmem:[#allocation4 + $0x20] sm:$0xff]
    %v186 = vld [vmem:[#allocation4 + $0x28] sm:$0xff]
    %v187 = vld [vmem:[#allocation4 + $0x30] sm:$0xff]
    %v188 = vld [vmem:[#allocation4 + $0x38] sm:$0xff]
    %v189 = vld [vmem:[#allocation6] sm:$0xf]
    %v191 = vperm.slane %v189, 0
    %v192 = vperm.slane %v189, 1
    %v193 = vperm.slane %v189, 2
    %v194 = vperm.slane %v189, 3
    %v207 = vunpack.c.l.b16 %v181
    %v208 = vunpack.c.h.b16 %v181
    %v209 = vunpack.c.l.b16 %v182
    %v210 = vunpack.c.h.b16 %v182
    %v211 = vunpack.c.l.b16 %v183
    %v212 = vunpack.c.h.b16 %v183
    %v213 = vunpack.c.l.b16 %v184
    %v214 = vunpack.c.h.b16 %v184
    %v215 = vunpack.c.l.b16 %v185
    %v216 = vunpack.c.h.b16 %v185
    %v217 = vunpack.c.l.b16 %v186
    %v218 = vunpack.c.h.b16 %v186
    %v219 = vunpack.c.l.b16 %v187
    %v220 = vunpack.c.h.b16 %v187
    %v221 = vunpack.c.l.b16 %v188
    %v222 = vunpack.c.h.b16 %v188
    %v223 = vpack.c.b16 %v211, %v207
    %v224 = vpack.c.b16 %v212, %v208
    %v225 = vpack.c.b16 %v213, %v209
    %v226 = vpack.c.b16 %v214, %v210
    %v227 = vpack.c.b16 %v219, %v215
    %v228 = vpack.c.b16 %v220, %v216
    %v229 = vpack.c.b16 %v221, %v217
    %v230 = vpack.c.b16 %v222, %v218
    %vm239 = vcmask 261120
    %v241 = vsel %vm239, %v180, 0
    %243 = vmatpush.bf16.msra.mxu0 0
    %244 = vmatpush.bf16.msra.mxu0 0
    %245 = vmatpush.bf16.msra.mxu0 0
    %246 = vmatpush.bf16.msra.mxu0 0
    %247 = vmatpush.bf16.msra.mxu0 0
    %248 = vmatpush.bf16.msra.mxu0 0
    %249 = vmatpush.bf16.msra.mxu0 %v227
    %250 = vmatpush.bf16.msra.mxu0 %v223
    %251 = vmatmul.bf16.gmra.mxu0 %v241
    %v252 = vpop.f32.mrf.mxu0
    %v253 = vadd.f32 %v191, %v252
    %v254 = vpop.f32.mrf.mxu0
    %255 = vdwg.mxu0
    %256 = vmatpush.bf16.msra.mxu0 0
    %257 = vmatpush.bf16.msra.mxu0 0
    %258 = vmatpush.bf16.msra.mxu0 0
    %259 = vmatpush.bf16.msra.mxu0 0
    %260 = vmatpush.bf16.msra.mxu0 0
    %261 = vmatpush.bf16.msra.mxu0 0
    %262 = vmatpush.bf16.msra.mxu0 %v228
    %263 = vmatpush.bf16.msra.mxu0 %v224
    %264 = vmatmul.bf16.gmra.mxu0 %v241
    %v265 = vpop.f32.mrf.mxu0
    %v266 = vadd.f32 %v192, %v265
    %v267 = vpop.f32.mrf.mxu0
    %268 = vdwg.mxu0
    %269 = vmatpush.bf16.msra.mxu0 0
    %270 = vmatpush.bf16.msra.mxu0 0
    %271 = vmatpush.bf16.msra.mxu0 0
    %272 = vmatpush.bf16.msra.mxu0 0
    %273 = vmatpush.bf16.msra.mxu0 0
    %274 = vmatpush.bf16.msra.mxu0 0
    %275 = vmatpush.bf16.msra.mxu0 %v229
    %276 = vmatpush.bf16.msra.mxu0 %v225
    %277 = vmatmul.bf16.gmra.mxu0 %v241
    %v278 = vpop.f32.mrf.mxu0
    %v279 = vadd.f32 %v193, %v278
    %v280 = vpop.f32.mrf.mxu0
    %281 = vdwg.mxu0
    %282 = vmatpush.bf16.msra.mxu0 0
    %283 = vmatpush.bf16.msra.mxu0 0
    %284 = vmatpush.bf16.msra.mxu0 0
    %285 = vmatpush.bf16.msra.mxu0 0
    %286 = vmatpush.bf16.msra.mxu0 0
    %287 = vmatpush.bf16.msra.mxu0 0
    %288 = vmatpush.bf16.msra.mxu0 %v230
    %289 = vmatpush.bf16.msra.mxu0 %v226
    %290 = vmatmul.bf16.gmra.mxu0 %v241
    %v291 = vpop.f32.mrf.mxu0
    %v292 = vadd.f32 %v194, %v291
    %v293 = vpop.f32.mrf.mxu0
    %294 = vdwg.mxu0
    %v295 = vld [vmem:[#allocation7] sm:$0xf]
    %vm296 = vcmp.gt.f32.partialorder %v253, 0.0
    %vm297 = vcmp.gt.f32.partialorder %v266, 0.0
    %vm298 = vcmp.gt.f32.partialorder %v279, 0.0
    %vm299 = vcmp.gt.f32.partialorder %v292, 0.0
    %v301 = vperm.slane %v295, 0
    %v302 = vperm.slane %v295, 1
    %v303 = vperm.slane %v295, 2
    %v304 = vperm.slane %v295, 3
    %v309 = vmul.f32 %v301, %v253
    %v310 = vmul.f32 %v302, %v266
    %v311 = vmul.f32 %v303, %v279
    %v312 = vmul.f32 %v304, %v292
    %v313 = vsel %vm296, %v253, %v309
    %v314 = vsel %vm297, %v266, %v310
    %v315 = vsel %vm298, %v279, %v311
    %v316 = vsel %vm299, %v292, %v312
    %v317 = vpack.c.bf16 %v315, %v313
    %v318 = vpack.c.bf16 %v316, %v314
    %v319 = vld [vmem:[#allocation9] sm:$0xff]
    %v320 = vld [vmem:[#allocation9 + $0x8] sm:$0xff]
    %v321 = vld [vmem:[#allocation9 + $0x10] sm:$0xff]
    %v322 = vld [vmem:[#allocation9 + $0x18] sm:$0xff]
    %v323 = vld [vmem:[#allocation9 + $0x20] sm:$0xff]
    %v324 = vld [vmem:[#allocation9 + $0x28] sm:$0xff]
    %v325 = vld [vmem:[#allocation9 + $0x30] sm:$0xff]
    %v326 = vld [vmem:[#allocation9 + $0x38] sm:$0xff]
    %v327 = vld [vmem:[#allocation9 + $0x40] sm:$0xff]
    %v328 = vld [vmem:[#allocation9 + $0x48] sm:$0xff]
    %v329 = vld [vmem:[#allocation9 + $0x50] sm:$0xff]
    %v330 = vld [vmem:[#allocation9 + $0x58] sm:$0xff]
    %v331 = vld [vmem:[#allocation9 + $0x60] sm:$0xff]
    %v332 = vld [vmem:[#allocation9 + $0x68] sm:$0xff]
    %v333 = vld [vmem:[#allocation9 + $0x70] sm:$0xff]
    %v334 = vld [vmem:[#allocation9 + $0x78] sm:$0xff]
    %v335 = vld [vmem:[#allocation9 + $0x80] sm:$0xff]
    %v336 = vld [vmem:[#allocation9 + $0x88] sm:$0xff]
    %v337 = vld [vmem:[#allocation9 + $0x90] sm:$0xff]
    %v338 = vld [vmem:[#allocation9 + $0x98] sm:$0xff]
    %v339 = vld [vmem:[#allocation9 + $0xa0] sm:$0xff]
    %v340 = vld [vmem:[#allocation9 + $0xa8] sm:$0xff]
    %v341 = vld [vmem:[#allocation9 + $0xb0] sm:$0xff]
    %v342 = vld [vmem:[#allocation9 + $0xb8] sm:$0xff]
    %v343 = vld [vmem:[#allocation9 + $0xc0] sm:$0xff]
    %v344 = vld [vmem:[#allocation9 + $0xc8] sm:$0xff]
    %v345 = vld [vmem:[#allocation9 + $0xd0] sm:$0xff]
    %v346 = vld [vmem:[#allocation9 + $0xd8] sm:$0xff]
    %v347 = vld [vmem:[#allocation9 + $0xe0] sm:$0xff]
    %v348 = vld [vmem:[#allocation9 + $0xe8] sm:$0xff]
    %v349 = vld [vmem:[#allocation9 + $0xf0] sm:$0xff]
    %v350 = vld [vmem:[#allocation9 + $0xf8] sm:$0xff]
    %v351 = vld [vmem:[#allocation10] sm:$0x3]
    %v353 = vperm.slane %v351, 0
    %v354 = vperm.slane %v351, 1
    %v389 = vunpack.c.l.b16 %v319
    %v390 = vunpack.c.h.b16 %v319
    %v391 = vunpack.c.l.b16 %v320
    %v392 = vunpack.c.h.b16 %v320
    %v393 = vunpack.c.l.b16 %v321
    %v394 = vunpack.c.h.b16 %v321
    %v395 = vunpack.c.l.b16 %v322
    %v396 = vunpack.c.h.b16 %v322
    %v397 = vunpack.c.l.b16 %v323
    %v398 = vunpack.c.h.b16 %v323
    %v399 = vunpack.c.l.b16 %v324
    %v400 = vunpack.c.h.b16 %v324
    %v401 = vunpack.c.l.b16 %v325
    %v402 = vunpack.c.h.b16 %v325
    %v403 = vunpack.c.l.b16 %v326
    %v404 = vunpack.c.h.b16 %v326
    %v405 = vunpack.c.l.b16 %v327
    %v406 = vunpack.c.h.b16 %v327
    %v407 = vunpack.c.l.b16 %v328
    %v408 = vunpack.c.h.b16 %v328
    %v409 = vunpack.c.l.b16 %v329
    %v410 = vunpack.c.h.b16 %v329
    %v411 = vunpack.c.l.b16 %v330
    %v412 = vunpack.c.h.b16 %v330
    %v413 = vunpack.c.l.b16 %v331
    %v414 = vunpack.c.h.b16 %v331
    %v415 = vunpack.c.l.b16 %v332
    %v416 = vunpack.c.h.b16 %v332
    %v417 = vunpack.c.l.b16 %v333
    %v418 = vunpack.c.h.b16 %v333
    %v419 = vunpack.c.l.b16 %v334
    %v420 = vunpack.c.h.b16 %v334
    %v421 = vunpack.c.l.b16 %v335
    %v422 = vunpack.c.h.b16 %v335
    %v423 = vunpack.c.l.b16 %v336
    %v424 = vunpack.c.h.b16 %v336
    %v425 = vunpack.c.l.b16 %v337
    %v426 = vunpack.c.h.b16 %v337
    %v427 = vunpack.c.l.b16 %v338
    %v428 = vunpack.c.h.b16 %v338
    %v429 = vunpack.c.l.b16 %v339
    %v430 = vunpack.c.h.b16 %v339
    %v431 = vunpack.c.l.b16 %v340
    %v432 = vunpack.c.h.b16 %v340
    %v433 = vunpack.c.l.b16 %v341
    %v434 = vunpack.c.h.b16 %v341
    %v435 = vunpack.c.l.b16 %v342
    %v436 = vunpack.c.h.b16 %v342
    %v437 = vunpack.c.l.b16 %v343
    %v438 = vunpack.c.h.b16 %v343
    %v439 = vunpack.c.l.b16 %v344
    %v440 = vunpack.c.h.b16 %v344
    %v441 = vunpack.c.l.b16 %v345
    %v442 = vunpack.c.h.b16 %v345
    %v443 = vunpack.c.l.b16 %v346
    %v444 = vunpack.c.h.b16 %v346
    %v445 = vunpack.c.l.b16 %v347
    %v446 = vunpack.c.h.b16 %v347
    %v447 = vunpack.c.l.b16 %v348
    %v448 = vunpack.c.h.b16 %v348
    %v449 = vunpack.c.l.b16 %v349
    %v450 = vunpack.c.h.b16 %v349
    %v451 = vunpack.c.l.b16 %v350
    %v452 = vunpack.c.h.b16 %v350
    %v453 = vpack.c.b16 %v391, %v389
    %v454 = vpack.c.b16 %v392, %v390
    %v455 = vpack.c.b16 %v395, %v393
    %v456 = vpack.c.b16 %v396, %v394
    %v457 = vpack.c.b16 %v399, %v397
    %v458 = vpack.c.b16 %v400, %v398
    %v459 = vpack.c.b16 %v403, %v401
    %v460 = vpack.c.b16 %v404, %v402
    %v461 = vpack.c.b16 %v407, %v405
    %v462 = vpack.c.b16 %v408, %v406
    %v463 = vpack.c.b16 %v411, %v409
    %v464 = vpack.c.b16 %v412, %v410
    %v465 = vpack.c.b16 %v415, %v413
    %v466 = vpack.c.b16 %v416, %v414
    %v467 = vpack.c.b16 %v419, %v417
    %v468 = vpack.c.b16 %v420, %v418
    %v469 = vpack.c.b16 %v423, %v421
    %v470 = vpack.c.b16 %v424, %v422
    %v471 = vpack.c.b16 %v427, %v425
    %v472 = vpack.c.b16 %v428, %v426
    %v473 = vpack.c.b16 %v431, %v429
    %v474 = vpack.c.b16 %v432, %v430
    %v475 = vpack.c.b16 %v435, %v433
    %v476 = vpack.c.b16 %v436, %v434
    %v477 = vpack.c.b16 %v439, %v437
    %v478 = vpack.c.b16 %v440, %v438
    %v479 = vpack.c.b16 %v443, %v441
    %v480 = vpack.c.b16 %v444, %v442
    %v481 = vpack.c.b16 %v447, %v445
    %v482 = vpack.c.b16 %v448, %v446
    %v483 = vpack.c.b16 %v451, %v449
    %v484 = vpack.c.b16 %v452, %v450
    %517 = vmatpush.bf16.msra.mxu0 %v467
    %518 = vmatpush.bf16.msra.mxu0 %v465
    %519 = vmatpush.bf16.msra.mxu0 %v463
    %520 = vmatpush.bf16.msra.mxu0 %v461
    %521 = vmatpush.bf16.msra.mxu0 %v459
    %522 = vmatpush.bf16.msra.mxu0 %v457
    %523 = vmatpush.bf16.msra.mxu0 %v455
    %524 = vmatpush.bf16.msra.mxu0 %v453
    %525 = vmatmul.bf16.gmra.mxu0 %v317
    %v526 = vpop.f32.mrf.mxu0
    %v527 = vadd.f32 %v353, %v526
    %v528 = vpop.f32.mrf.mxu0
    %529 = vdwg.mxu0
    %530 = vmatpush.bf16.msra.mxu0 %v483
    %531 = vmatpush.bf16.msra.mxu0 %v481
    %532 = vmatpush.bf16.msra.mxu0 %v479
    %533 = vmatpush.bf16.msra.mxu0 %v477
    %534 = vmatpush.bf16.msra.mxu0 %v475
    %535 = vmatpush.bf16.msra.mxu0 %v473
    %536 = vmatpush.bf16.msra.mxu0 %v471
    %537 = vmatpush.bf16.msra.mxu0 %v469
    %538 = vmatmul.bf16.gmra.mxu0 %v318
    %v539 = vpop.f32.mrf.mxu0
    %v540 = vadd.f32 %v527, %v539
    %v541 = vpop.f32.mrf.mxu0
    %542 = vdwg.mxu0
    %543 = vmatpush.bf16.msra.mxu0 %v468
    %544 = vmatpush.bf16.msra.mxu0 %v466
    %545 = vmatpush.bf16.msra.mxu0 %v464
    %546 = vmatpush.bf16.msra.mxu0 %v462
    %547 = vmatpush.bf16.msra.mxu0 %v460
    %548 = vmatpush.bf16.msra.mxu0 %v458
    %549 = vmatpush.bf16.msra.mxu0 %v456
    %550 = vmatpush.bf16.msra.mxu0 %v454
    %551 = vmatmul.bf16.gmra.mxu0 %v317
    %v552 = vpop.f32.mrf.mxu0
    %v553 = vpop.f32.mrf.mxu0
    %v554 = vadd.f32 %v354, %v553
    %555 = vdwg.mxu0
    %556 = vmatpush.bf16.msra.mxu0 %v484
    %557 = vmatpush.bf16.msra.mxu0 %v482
    %558 = vmatpush.bf16.msra.mxu0 %v480
    %559 = vmatpush.bf16.msra.mxu0 %v478
    %560 = vmatpush.bf16.msra.mxu0 %v476
    %561 = vmatpush.bf16.msra.mxu0 %v474
    %562 = vmatpush.bf16.msra.mxu0 %v472
    %563 = vmatpush.bf16.msra.mxu0 %v470
    %564 = vmatmul.bf16.gmra.mxu0 %v318
    %v565 = vpop.f32.mrf.mxu0
    %v566 = vpop.f32.mrf.mxu0
    %v567 = vadd.f32 %v554, %v566
    %568 = vdwg.mxu0
    %v569 = vld [vmem:[#allocation12] sm:$0x3]
    %vm570 = vcmp.gt.f32.partialorder %v540, 0.0
    %vm571 = vcmp.gt.f32.partialorder %v567, 0.0
    %v573 = vperm.slane %v569, 0
    %v574 = vperm.slane %v569, 1
    %v577 = vmul.f32 %v573, %v540
    %v578 = vmul.f32 %v574, %v567
    %v579 = vsel %vm570, %v540, %v577
    %v580 = vsel %vm571, %v567, %v578
    %v581 = vpack.c.bf16 %v580, %v579
    %v582 = vld [vmem:[#allocation13] sm:$0xf]
    %v583 = vld [vmem:[#allocation13 + $0x4] sm:$0xf]
    %v584 = vld [vmem:[#allocation13 + $0x8] sm:$0xf]
    %v585 = vld [vmem:[#allocation13 + $0xc] sm:$0xf]
    %v586 = vld [vmem:[#allocation13 + $0x10] sm:$0xf]
    %v587 = vld [vmem:[#allocation13 + $0x14] sm:$0xf]
    %v588 = vld [vmem:[#allocation13 + $0x18] sm:$0xf]
    %v589 = vld [vmem:[#allocation13 + $0x1c] sm:$0xf]
    %v590 = vld [vmem:[#allocation13 + $0x20] sm:$0xf]
    %v591 = vld [vmem:[#allocation13 + $0x24] sm:$0xf]
    %v592 = vld [vmem:[#allocation13 + $0x28] sm:$0xf]
    %v593 = vld [vmem:[#allocation13 + $0x2c] sm:$0xf]
    %v594 = vld [vmem:[#allocation13 + $0x30] sm:$0xf]
    %v595 = vld [vmem:[#allocation13 + $0x34] sm:$0xf]
    %v596 = vld [vmem:[#allocation13 + $0x38] sm:$0xf]
    %v597 = vld [vmem:[#allocation13 + $0x3c] sm:$0xf]
    %v598 = vld [vmem:[%s8] sm:$0x1]
    %v600 = vperm.slane %v598, 0
    %v618 = vunpack.c.l.b16 %v582
    %v619 = vunpack.c.l.b16 %v583
    %v620 = vunpack.c.l.b16 %v584
    %v621 = vunpack.c.l.b16 %v585
    %v622 = vunpack.c.l.b16 %v586
    %v623 = vunpack.c.l.b16 %v587
    %v624 = vunpack.c.l.b16 %v588
    %v625 = vunpack.c.l.b16 %v589
    %v626 = vunpack.c.l.b16 %v590
    %v627 = vunpack.c.l.b16 %v591
    %v628 = vunpack.c.l.b16 %v592
    %v629 = vunpack.c.l.b16 %v593
    %v630 = vunpack.c.l.b16 %v594
    %v631 = vunpack.c.l.b16 %v595
    %v632 = vunpack.c.l.b16 %v596
    %v633 = vunpack.c.l.b16 %v597
    %v634 = vpack.c.b16 %v619, %v618
    %v635 = vpack.c.b16 %v621, %v620
    %v636 = vpack.c.b16 %v623, %v622
    %v637 = vpack.c.b16 %v625, %v624
    %v638 = vpack.c.b16 %v627, %v626
    %v639 = vpack.c.b16 %v629, %v628
    %v640 = vpack.c.b16 %v631, %v630
    %v641 = vpack.c.b16 %v633, %v632
    %650 = vmatpush.bf16.msra.mxu0 %v641
    %651 = vmatpush.bf16.msra.mxu0 %v640
    %652 = vmatpush.bf16.msra.mxu0 %v639
    %653 = vmatpush.bf16.msra.mxu0 %v638
    %654 = vmatpush.bf16.msra.mxu0 %v637
    %655 = vmatpush.bf16.msra.mxu0 %v636
    %656 = vmatpush.bf16.msra.mxu0 %v635
    %657 = vmatpush.bf16.msra.mxu0 %v634
    %658 = vmatmul.bf16.gmra.mxu0 %v581
    %v659 = vpop.f32.mrf.mxu0
    %v660 = vadd.f32 %v600, %v659
    %v661 = vpop.f32.mrf.mxu0
    %v662 = vadd.f32 %v600, %v661
    %663 = vdwg.mxu0
    %v664 = vld [vmem:[#allocation15] sm:$0x1]
    %vm665 = vcmp.gt.f32.partialorder %v660, 0.0
    %vm666 = vcmp.gt.f32.partialorder %v662, 0.0
    %v668 = vperm.slane %v664, 0
    %v670 = vmul.f32 %v668, %v660
    %v671 = vmul.f32 %v668, %v662
    %v672 = vsel %vm665, %v660, %v670
    %v673 = vsel %vm666, %v662, %v671
    %675 = vrot.lane.b32.xlu0 %v673, 64
    %v676 = vpop.permute.xlu0 %675
    %v678 = vpack.c.bf16 %v676, %v672
    %v679 = vld [vmem:[%s10] sm:$0xf]
    %v680 = vld [vmem:[%s10 + $0x4] sm:$0xf]
    %v681 = vld [vmem:[%s10 + $0x8] sm:$0xf]
    %v682 = vld [vmem:[%s10 + $0xc] sm:$0xf]
    %v683 = vld [vmem:[%s10 + $0x10] sm:$0xf]
    %v684 = vld [vmem:[%s10 + $0x14] sm:$0xf]
    %v685 = vld [vmem:[%s10 + $0x18] sm:$0xf]
    %v686 = vld [vmem:[%s10 + $0x1c] sm:$0xf]
    %v687 = vld [vmem:[%s11] sm:$0x1]
    %v689 = vperm.slane %v687, 0
    %v699 = vunpack.c.l.b16 %v679
    %v700 = vunpack.c.l.b16 %v680
    %v701 = vunpack.c.l.b16 %v681
    %v702 = vunpack.c.l.b16 %v682
    %v703 = vunpack.c.l.b16 %v683
    %v704 = vunpack.c.l.b16 %v684
    %v705 = vunpack.c.l.b16 %v685
    %v706 = vunpack.c.l.b16 %v686
    %v707 = vpack.c.b16 %v700, %v699
    %v708 = vpack.c.b16 %v702, %v701
    %v709 = vpack.c.b16 %v704, %v703
    %v710 = vpack.c.b16 %v706, %v705
    %vm715 = vcmask 523264
    %v717 = vsel %vm715, %v678, 0
    %719 = vmatpush.bf16.msra.mxu0 0
    %720 = vmatpush.bf16.msra.mxu0 0
    %721 = vmatpush.bf16.msra.mxu0 0
    %722 = vmatpush.bf16.msra.mxu0 0
    %723 = vmatpush.bf16.msra.mxu0 %v710
    %724 = vmatpush.bf16.msra.mxu0 %v709
    %725 = vmatpush.bf16.msra.mxu0 %v708
    %726 = vmatpush.bf16.msra.mxu0 %v707
    %727 = vmatmul.bf16.gmra.mxu0 %v717
    %v728 = vpop.f32.mrf.mxu0
    %v729 = vadd.f32 %v689, %v728
    %v730 = vpop.f32.mrf.mxu0
    %v731 = vadd.f32 %v689, %v730
    %732 = vdwg.mxu0
    %v733 = vld [vmem:[%s12] sm:$0x1]
    %vm734 = vcmp.gt.f32.partialorder %v729, 0.0
    %vm735 = vcmp.gt.f32.partialorder %v731, 0.0
    %v737 = vperm.slane %v733, 0
    %v739 = vmul.f32 %v737, %v729
    %v740 = vmul.f32 %v737, %v731
    %v741 = vsel %vm734, %v729, %v739
    %v742 = vsel %vm735, %v731, %v740
    %744 = vrot.lane.b32.xlu0 %v742, 96
    %v745 = vpop.permute.xlu0 %744
    %v747 = vpack.c.bf16 %v745, %v741
    %v748 = vld [vmem:[%s13] sm:$0xf]
    %v749 = vld [vmem:[%s13 + $0x4] sm:$0xf]
    %v750 = vld [vmem:[%s13 + $0x8] sm:$0xf]
    %v751 = vld [vmem:[%s13 + $0xc] sm:$0xf]
    %v752 = vld [vmem:[%s14] sm:$0x1]
    %v754 = vperm.slane %v752, 0
    %v760 = vunpack.c.l.b16 %v748
    %v761 = vunpack.c.l.b16 %v749
    %v762 = vunpack.c.l.b16 %v750
    %v763 = vunpack.c.l.b16 %v751
    %v764 = vpack.c.b16 %v761, %v760
    %v765 = vpack.c.b16 %v763, %v762
    %v769 = vsel %vm239, %v747, 0
    %771 = vmatpush.bf16.msra.mxu0 0
    %772 = vmatpush.bf16.msra.mxu0 0
    %773 = vmatpush.bf16.msra.mxu0 0
    %774 = vmatpush.bf16.msra.mxu0 0
    %775 = vmatpush.bf16.msra.mxu0 0
    %776 = vmatpush.bf16.msra.mxu0 0
    %777 = vmatpush.bf16.msra.mxu0 %v765
    %778 = vmatpush.bf16.msra.mxu0 %v764
    %779 = vmatmul.bf16.gmra.mxu0 %v769
    %v780 = vpop.f32.mrf.mxu0
    %v781 = vadd.f32 %v754, %v780
    %v782 = vpop.f32.mrf.mxu0
    %v783 = vadd.f32 %v754, %v782
    %784 = vdwg.mxu0
    %v785 = vlaneseq
    %v786 = vand.u32 %v785, 127
    %vm787 = vcmp.lt.s32.totalorder %v786, 8
    %v788 = vsel %vm787, %v781, %v783
    %vm789 = vcmask 130048
    %790 = vst.msk [vmem:[%s15] sm:$0xff] %vm789, %v788
    // Predicated region
    $region98: #{prior_net_forward.1} parent=1 // pred_check
      _
    $region99: #{prior_net_forward.1} parent=1 // pred_check_branch
      %792 = sbr.rel (0) target = $region101
    $region100: #{prior_net_forward.1} parent=1 // pred_region
      _
    $region101: #{prior_net_forward.1} parent=1 // pred_fallthru
      _
    // Predicated region
    $region102: #{prior_net_forward.1} parent=1 // pred_check
      _
    $region103: #{prior_net_forward.1} parent=1 // pred_check_branch
      %794 = sbr.rel (0) target = $region105
    $region104: #{prior_net_forward.1} parent=1 // pred_region
      _
    $region105: #{prior_net_forward.1} parent=1 // pred_fallthru
      _
    %795 = vsyncpa [#allocation3], 1
    %796 = vsyncpa [#allocation5], 1
    %797 = vsyncpa [#allocation8], 1
    %798 = vsyncpa [#allocation11], 1
    %799 = vsyncpa [#allocation14], 1

</llo_original>
